<compile_context>
chip_gen: v6e
topology: v6e:2x2x1
jax: 0.10.0
libtpu: 0.0.40
codegen_flags: <defaults>
</compile_context>

<pallas_src>
import functools

import jax
import jax.numpy as jnp
from jax.experimental import pallas as pl
from jax.experimental.pallas import tpu as pltpu

LANE = 128
SUBLANE = 8


def _round_up(n, m):
    return ((n + m - 1) // m) * m


def blob_mlp_kernel(x_ref, w1_ref, b1_ref, w2_ref, b2_ref, w3_ref, b3_ref, out_ref):
    # Layer 1: [TB, INP] @ [INP, HP] + [1, HP]   (padded lanes stay zero)
    h1 = jnp.dot(x_ref[...], w1_ref[...], preferred_element_type=jnp.float32) + b1_ref[...]
    # Layer 2: [TB, HP] @ [HP, HP] + [1, HP]
    h2 = jnp.dot(h1, w2_ref[...], preferred_element_type=jnp.float32) + b2_ref[...]
    # Layer 3: [TB, HP] @ [HP, OUTP] + [1, OUTP]
    out = jnp.dot(h2, w3_ref[...], preferred_element_type=jnp.float32) + b3_ref[...]
    out_ref[...] = out.astype(out_ref.dtype)  # lane-dense, unmasked store


def _pad2d(a, rows, cols):
    return jnp.pad(a, ((0, rows - a.shape[0]), (0, cols - a.shape[1])))


@functools.partial(jax.jit, static_argnames=("tb",))
def blob_model_forward(x, w1, b1, w2, b2, w3, b3, *, tb=512):
    """x: [B, in_features]; weights as [in, out]; biases as [1, out]."""
    B, IN = x.shape
    H = w1.shape[1]
    OUT = w3.shape[1]

    # Pad feature dims to full lane width; pad batch to a sublane-aligned tile.
    INP = _round_up(IN, LANE)
    HP = _round_up(H, LANE)
    OUTP = _round_up(OUT, LANE)
    tb_eff = min(tb, _round_up(B, SUBLANE))
    B_pad = _round_up(B, tb_eff)
    n_tiles = B_pad // tb_eff

    x_p = _pad2d(x, B_pad, INP)
    w1_p, b1_p = _pad2d(w1, INP, HP), _pad2d(b1, 1, HP)
    w2_p, b2_p = _pad2d(w2, HP, HP), _pad2d(b2, 1, HP)
    w3_p, b3_p = _pad2d(w3, HP, OUTP), _pad2d(b3, 1, OUTP)

    cost = pl.CostEstimate(
        flops=2 * B * (IN * H + H * H + H * OUT),
        transcendentals=0,
        bytes_accessed=4 * (x.size + w1.size + b1.size + w2.size + b2.size
                            + w3.size + b3.size + B * OUT),
    )

    out_padded = pl.pallas_call(
        blob_mlp_kernel,
        out_shape=jax.ShapeDtypeStruct((B_pad, OUTP), jnp.float32),
        grid=(n_tiles,),
        in_specs=[
            pl.BlockSpec((tb_eff, INP), lambda i: (i, 0)),   # x: tiled over batch
            pl.BlockSpec((INP, HP), lambda i: (0, 0)),       # weights / biases stay
            pl.BlockSpec((1, HP), lambda i: (0, 0)),         # VMEM-resident across
            pl.BlockSpec((HP, HP), lambda i: (0, 0)),        # all grid steps
            pl.BlockSpec((1, HP), lambda i: (0, 0)),
            pl.BlockSpec((HP, OUTP), lambda i: (0, 0)),
            pl.BlockSpec((1, OUTP), lambda i: (0, 0)),
        ],
        out_specs=pl.BlockSpec((tb_eff, OUTP), lambda i: (i, 0)),
        compiler_params=pltpu.CompilerParams(
            dimension_semantics=("parallel",),
        ),
        cost_estimate=cost,
    )(x_p, w1_p, b1_p, w2_p, b2_p, w3_p, b3_p)

    return out_padded[:B, :OUT]


def init_params(key, input_features, output_features, hidden_units=8):
    """Deterministic init mimicking nn.Linear's U(-1/sqrt(fan_in), 1/sqrt(fan_in))."""
    ks = jax.random.split(key, 6)

    def linear(kw, kb, fan_in, fan_out):
        bound = 1.0 / jnp.sqrt(fan_in)
        w = jax.random.uniform(kw, (fan_in, fan_out), jnp.float32, -bound, bound)
        b = jax.random.uniform(kb, (1, fan_out), jnp.float32, -bound, bound)
        return w, b

    w1, b1 = linear(ks[0], ks[1], input_features, hidden_units)
    w2, b2 = linear(ks[2], ks[3], hidden_units, hidden_units)
    w3, b3 = linear(ks[4], ks[5], hidden_units, output_features)
    return w1, b1, w2, b2, w3, b3


if __name__ == "__main__":
    key = jax.random.PRNGKey(0)
    k_x, k_p = jax.random.split(key)

    batch = 8
    input_features = 2    # e.g. 2D blob coordinates
    output_features = 4   # number of classes
    hidden_units = 8

    x = jax.random.normal(k_x, (batch, input_features), dtype=jnp.float32)
    params = init_params(k_p, input_features, output_features, hidden_units)

    out = blob_model_forward(x, *params)
    jax.block_until_ready(out)

    # Pure-JAX reference check
    w1, b1, w2, b2, w3, b3 = params
    ref = ((x @ w1 + b1) @ w2 + b2) @ w3 + b3
    assert out.shape == (batch, output_features)
    assert jnp.allclose(out, ref, atol=1e-5, rtol=1e-5)

    print("KERNEL_OK")
</pallas_src>

<mosaic_0001>
module attributes {stable_mosaic.version = 11 : i64} {
  func.func @blob_mlp_kernel(%arg0: i32, %arg1: memref<8x128xf32, #tpu.memory_space<vmem>>, %arg2: memref<128x128xf32, #tpu.memory_space<vmem>>, %arg3: memref<1x128xf32, #tpu.memory_space<vmem>>, %arg4: memref<128x128xf32, #tpu.memory_space<vmem>>, %arg5: memref<1x128xf32, #tpu.memory_space<vmem>>, %arg6: memref<128x128xf32, #tpu.memory_space<vmem>>, %arg7: memref<1x128xf32, #tpu.memory_space<vmem>>, %arg8: memref<8x128xf32, #tpu.memory_space<vmem>>) attributes {dimension_semantics = [#tpu.dimension_semantics<parallel>], iteration_bounds = array<i64: 1>, scalar_prefetch = 0 : i64, scratch_operands = 0 : i64, tpu.core_type = #tpu.core_type<tc>, window_params = [{transform_indices = @transform_0, window_bounds = array<i64: 8, 128>}, {pipeline_mode = #tpu.pipeline_mode<synchronous>, transform_indices = @transform_1, window_bounds = array<i64: 128, 128>}, {pipeline_mode = #tpu.pipeline_mode<synchronous>, transform_indices = @transform_2, window_bounds = array<i64: 1, 128>}, {pipeline_mode = #tpu.pipeline_mode<synchronous>, transform_indices = @transform_3, window_bounds = array<i64: 128, 128>}, {pipeline_mode = #tpu.pipeline_mode<synchronous>, transform_indices = @transform_4, window_bounds = array<i64: 1, 128>}, {pipeline_mode = #tpu.pipeline_mode<synchronous>, transform_indices = @transform_5, window_bounds = array<i64: 128, 128>}, {pipeline_mode = #tpu.pipeline_mode<synchronous>, transform_indices = @transform_6, window_bounds = array<i64: 1, 128>}, {transform_indices = @transform_7, window_bounds = array<i64: 8, 128>}]} {
    %c0 = arith.constant 0 : index
    %c0_0 = arith.constant 0 : index
    %0 = vector.load %arg1[%c0, %c0_0] : memref<8x128xf32, #tpu.memory_space<vmem>>, vector<8x128xf32>
    %c0_1 = arith.constant 0 : index
    %c0_2 = arith.constant 0 : index
    %1 = vector.load %arg2[%c0_1, %c0_2] : memref<128x128xf32, #tpu.memory_space<vmem>>, vector<128x128xf32>
    %cst = arith.constant dense<0.000000e+00> : vector<8x128xf32>
    %2 = tpu.matmul %0, %1, %cst {dimension_numbers = #tpu.dot_dimension_numbers<[1], [0], [0], [1], [0, 0, 1, 1], [], []>} : vector<8x128xf32>, vector<128x128xf32>, vector<8x128xf32> -> vector<8x128xf32>
    %c0_3 = arith.constant 0 : index
    %c0_4 = arith.constant 0 : index
    %3 = vector.load %arg3[%c0_3, %c0_4] : memref<1x128xf32, #tpu.memory_space<vmem>>, vector<1x128xf32>
    %4 = vector.broadcast %3 : vector<1x128xf32> to vector<8x128xf32>
    %5 = arith.addf %2, %4 : vector<8x128xf32>
    %c0_5 = arith.constant 0 : index
    %c0_6 = arith.constant 0 : index
    %6 = vector.load %arg4[%c0_5, %c0_6] : memref<128x128xf32, #tpu.memory_space<vmem>>, vector<128x128xf32>
    %cst_7 = arith.constant dense<0.000000e+00> : vector<8x128xf32>
    %7 = tpu.matmul %5, %6, %cst_7 {dimension_numbers = #tpu.dot_dimension_numbers<[1], [0], [0], [1], [0, 0, 1, 1], [], []>} : vector<8x128xf32>, vector<128x128xf32>, vector<8x128xf32> -> vector<8x128xf32>
    %c0_8 = arith.constant 0 : index
    %c0_9 = arith.constant 0 : index
    %8 = vector.load %arg5[%c0_8, %c0_9] : memref<1x128xf32, #tpu.memory_space<vmem>>, vector<1x128xf32>
    %9 = vector.broadcast %8 : vector<1x128xf32> to vector<8x128xf32>
    %10 = arith.addf %7, %9 : vector<8x128xf32>
    %c0_10 = arith.constant 0 : index
    %c0_11 = arith.constant 0 : index
    %11 = vector.load %arg6[%c0_10, %c0_11] : memref<128x128xf32, #tpu.memory_space<vmem>>, vector<128x128xf32>
    %cst_12 = arith.constant dense<0.000000e+00> : vector<8x128xf32>
    %12 = tpu.matmul %10, %11, %cst_12 {dimension_numbers = #tpu.dot_dimension_numbers<[1], [0], [0], [1], [0, 0, 1, 1], [], []>} : vector<8x128xf32>, vector<128x128xf32>, vector<8x128xf32> -> vector<8x128xf32>
    %c0_13 = arith.constant 0 : index
    %c0_14 = arith.constant 0 : index
    %13 = vector.load %arg7[%c0_13, %c0_14] : memref<1x128xf32, #tpu.memory_space<vmem>>, vector<1x128xf32>
    %14 = vector.broadcast %13 : vector<1x128xf32> to vector<8x128xf32>
    %15 = arith.addf %12, %14 : vector<8x128xf32>
    %c0_15 = arith.constant 0 : index
    %c0_16 = arith.constant 0 : index
    %16 = vector.load %arg8[%c0_15, %c0_16] : memref<8x128xf32, #tpu.memory_space<vmem>>, vector<8x128xf32>
    tpu.vector_store %arg8[%c0_15, %c0_16], %15 {strides = array<i32>} : memref<8x128xf32, #tpu.memory_space<vmem>>, vector<8x128xf32>,
    return
  }
  func.func @transform_0(%arg0: i32) -> (i32, i32) {
    %c0_i32 = arith.constant 0 : i32
    %c0_i32_0 = arith.constant 0 : i32
    return %arg0, %c0_i32 : i32, i32
  }
  func.func @transform_1(%arg0: i32) -> (i32, i32) {
    %c0_i32 = arith.constant 0 : i32
    %c0_i32_0 = arith.constant 0 : i32
    %c0_i32_1 = arith.constant 0 : i32
    return %c0_i32, %c0_i32_0 : i32, i32
  }
  func.func @transform_2(%arg0: i32) -> (i32, i32) {
    %c0_i32 = arith.constant 0 : i32
    %c0_i32_0 = arith.constant 0 : i32
    %c0_i32_1 = arith.constant 0 : i32
    return %c0_i32, %c0_i32_0 : i32, i32
  }
  func.func @transform_3(%arg0: i32) -> (i32, i32) {
    %c0_i32 = arith.constant 0 : i32
    %c0_i32_0 = arith.constant 0 : i32
    %c0_i32_1 = arith.constant 0 : i32
    return %c0_i32, %c0_i32_0 : i32, i32
  }
  func.func @transform_4(%arg0: i32) -> (i32, i32) {
    %c0_i32 = arith.constant 0 : i32
    %c0_i32_0 = arith.constant 0 : i32
    %c0_i32_1 = arith.constant 0 : i32
    return %c0_i32, %c0_i32_0 : i32, i32
  }
  func.func @transform_5(%arg0: i32) -> (i32, i32) {
    %c0_i32 = arith.constant 0 : i32
    %c0_i32_0 = arith.constant 0 : i32
    %c0_i32_1 = arith.constant 0 : i32
    return %c0_i32, %c0_i32_0 : i32, i32
  }
  func.func @transform_6(%arg0: i32) -> (i32, i32) {
    %c0_i32 = arith.constant 0 : i32
    %c0_i32_0 = arith.constant 0 : i32
    %c0_i32_1 = arith.constant 0 : i32
    return %c0_i32, %c0_i32_0 : i32, i32
  }
  func.func @transform_7(%arg0: i32) -> (i32, i32) {
    %c0_i32 = arith.constant 0 : i32
    %c0_i32_0 = arith.constant 0 : i32
    return %arg0, %c0_i32 : i32, i32
  }
}

</mosaic_0001>

<llo_original>
// kernel: blob_model_forward.1
$region0: #{blob_model_forward.1}
  #allocation0 [shape = 'u32[]', space=smem, size = 0x4, offset = 0x4, fixed_abs, tag = 'smem constant byte address 0x4 - core index']
  #allocation1 [shape = 'u32[144,128]{1,0:T(1,128)}', space=vmem, size = 0x12000, scoped, tag = 'internal scratch']
  %s0 = inlined_call_operand.vmem [shape: f32[8,128], index: 0, kind: input, shape index: {}]
  %s1 = inlined_call_operand.vmem [shape: f32[128,128], index: 1, kind: input, shape index: {}]
  %s2 = inlined_call_operand.vmem [shape: f32[1,128], index: 2, kind: input, shape index: {}]
  %s3 = inlined_call_operand.vmem [shape: f32[128,128], index: 3, kind: input, shape index: {}]
  %s4 = inlined_call_operand.vmem [shape: f32[1,128], index: 4, kind: input, shape index: {}]
  %s5 = inlined_call_operand.vmem [shape: f32[128,128], index: 5, kind: input, shape index: {}]
  %s6 = inlined_call_operand.vmem [shape: f32[1,128], index: 6, kind: input, shape index: {}]
  %s7 = inlined_call_operand.vmem [shape: f32[8,128], index: 7, kind: output, shape index: {}]
  %s8 = sld [smem:[#allocation0]]
  $region38: #{blob_model_forward.1} parent=0
    _
  %s10 = ssub.s32 1, %s8
  %s11 = scalar_select 0, %s10, %s8
  // Predicated region
  $region2: #{blob_model_forward.1} parent=0 // pred_check
    _
  $region3: #{blob_model_forward.1} parent=0 // pred_check_branch
    %13 = sbr.rel (0) target = $region5
  $region4: #{blob_model_forward.1} parent=0 // pred_region
    _
  $region5: #{blob_model_forward.1} parent=0 // pred_fallthru
    _
  // Predicated region
  $region6: #{blob_model_forward.1} parent=0 // pred_check
    _
  $region7: #{blob_model_forward.1} parent=0 // pred_check_branch
    %15 = sbr.rel (0) target = $region9
  $region8: #{blob_model_forward.1} parent=0 // pred_region
    _
  $region9: #{blob_model_forward.1} parent=0 // pred_fallthru
    _
  // Predicated region
  $region10: #{blob_model_forward.1} parent=0 // pred_check
    _
  $region11: #{blob_model_forward.1} parent=0 // pred_check_branch
    %17 = sbr.rel (0) target = $region13
  $region12: #{blob_model_forward.1} parent=0 // pred_region
    _
  $region13: #{blob_model_forward.1} parent=0 // pred_fallthru
    _
  // Predicated region
  $region14: #{blob_model_forward.1} parent=0 // pred_check
    _
  $region15: #{blob_model_forward.1} parent=0 // pred_check_branch
    %19 = sbr.rel (0) target = $region17
  $region16: #{blob_model_forward.1} parent=0 // pred_region
    _
  $region17: #{blob_model_forward.1} parent=0 // pred_fallthru
    _
  // Predicated region
  $region18: #{blob_model_forward.1} parent=0 // pred_check
    _
  $region19: #{blob_model_forward.1} parent=0 // pred_check_branch
    %21 = sbr.rel (0) target = $region21
  $region20: #{blob_model_forward.1} parent=0 // pred_region
    _
  $region21: #{blob_model_forward.1} parent=0 // pred_fallthru
    _
  // Predicated region
  $region22: #{blob_model_forward.1} parent=0 // pred_check
    _
  $region23: #{blob_model_forward.1} parent=0 // pred_check_branch
    %23 = sbr.rel (0) target = $region25
  $region24: #{blob_model_forward.1} parent=0 // pred_region
    _
  $region25: #{blob_model_forward.1} parent=0 // pred_fallthru
    _
  // Predicated region
  $region26: #{blob_model_forward.1} parent=0 // pred_check
    _
  $region27: #{blob_model_forward.1} parent=0 // pred_check_branch
    %25 = sbr.rel (0) target = $region29
  $region28: #{blob_model_forward.1} parent=0 // pred_region
    _
  $region29: #{blob_model_forward.1} parent=0 // pred_fallthru
    _
  %v26 = vld [vmem:[%s0] sm:$0xff]
  %v27 = vld [vmem:[%s1] sm:$0xff]
  %v28 = vld [vmem:[%s1 + $0x8] sm:$0xff]
  %v29 = vld [vmem:[%s1 + $0x10] sm:$0xff]
  %v30 = vld [vmem:[%s1 + $0x18] sm:$0xff]
  %v31 = vld [vmem:[%s1 + $0x20] sm:$0xff]
  %v32 = vld [vmem:[%s1 + $0x28] sm:$0xff]
  %v33 = vld [vmem:[%s1 + $0x30] sm:$0xff]
  %v34 = vld [vmem:[%s1 + $0x38] sm:$0xff]
  %v35 = vld [vmem:[%s1 + $0x40] sm:$0xff]
  %v36 = vld [vmem:[%s1 + $0x48] sm:$0xff]
  %v37 = vld [vmem:[%s1 + $0x50] sm:$0xff]
  %v38 = vld [vmem:[%s1 + $0x58] sm:$0xff]
  %v39 = vld [vmem:[%s1 + $0x60] sm:$0xff]
  %v40 = vld [vmem:[%s1 + $0x68] sm:$0xff]
  %v41 = vld [vmem:[%s1 + $0x70] sm:$0xff]
  %v42 = vld [vmem:[%s1 + $0x78] sm:$0xff]
  %v43 = vld [vmem:[%s2] sm:$0x1]
  %v45 = vlaneseq
  %v46 = vshrl.u32 %v45, 7
  %v47 = vsub.s32 0, %v46
  %v48 = vrot.slane %v43, %v47
  %50 = vmatprep.subr.mxu0 0.0
  %51 = vmatpush1.msra.mxu0 %v42
  %52 = vmatprep.subr.mxu0 0.0
  %53 = vmatpush1.msra.mxu0 %v41
  %54 = vmatprep.subr.mxu0 0.0
  %55 = vmatpush1.msra.mxu0 %v40
  %56 = vmatprep.subr.mxu0 0.0
  %57 = vmatpush1.msra.mxu0 %v39
  %58 = vmatprep.subr.mxu0 0.0
  %59 = vmatpush1.msra.mxu0 %v38
  %60 = vmatprep.subr.mxu0 0.0
  %61 = vmatpush1.msra.mxu0 %v37
  %62 = vmatprep.subr.mxu0 0.0
  %63 = vmatpush1.msra.mxu0 %v36
  %64 = vmatprep.subr.mxu0 0.0
  %65 = vmatpush1.msra.mxu0 %v35
  %66 = vmatprep.subr.mxu0 0.0
  %67 = vmatpush1.msra.mxu0 %v34
  %68 = vmatprep.subr.mxu0 0.0
  %69 = vmatpush1.msra.mxu0 %v33
  %70 = vmatprep.subr.mxu0 0.0
  %71 = vmatpush1.msra.mxu0 %v32
  %72 = vmatprep.subr.mxu0 0.0
  %73 = vmatpush1.msra.mxu0 %v31
  %74 = vmatprep.subr.mxu0 0.0
  %75 = vmatpush1.msra.mxu0 %v30
  %76 = vmatprep.subr.mxu0 0.0
  %77 = vmatpush1.msra.mxu0 %v29
  %78 = vmatprep.subr.mxu0 0.0
  %79 = vmatpush1.msra.mxu0 %v28
  %80 = vmatprep.subr.mxu0 0.0
  %81 = vmatpush1.msra.mxu0 %v27
  %82 = vmatprep.subr.mxu0 0.0
  %83 = vmatpush2.msra.mxu0 0.0
  %84 = vmatprep.subr.mxu0 0.0
  %85 = vmatpush2.msra.mxu0 0.0
  %86 = vmatprep.subr.mxu0 0.0
  %87 = vmatpush2.msra.mxu0 0.0
  %88 = vmatprep.subr.mxu0 0.0
  %89 = vmatpush2.msra.mxu0 0.0
  %90 = vmatprep.subr.mxu0 0.0
  %91 = vmatpush2.msra.mxu0 0.0
  %92 = vmatprep.subr.mxu0 0.0
  %93 = vmatpush2.msra.mxu0 0.0
  %94 = vmatprep.subr.mxu0 0.0
  %95 = vmatpush2.msra.mxu0 0.0
  %96 = vmatprep.subr.mxu0 0.0
  %97 = vmatpush2.msra.mxu0 0.0
  %98 = vmatprep.subr.mxu0 0.0
  %99 = vmatpush2.msra.mxu0 0.0
  %100 = vmatprep.subr.mxu0 0.0
  %101 = vmatpush2.msra.mxu0 0.0
  %102 = vmatprep.subr.mxu0 0.0
  %103 = vmatpush2.msra.mxu0 0.0
  %104 = vmatprep.subr.mxu0 0.0
  %105 = vmatpush2.msra.mxu0 0.0
  %106 = vmatprep.subr.mxu0 0.0
  %107 = vmatpush2.msra.mxu0 0.0
  %108 = vmatprep.subr.mxu0 0.0
  %109 = vmatpush2.msra.mxu0 0.0
  %110 = vmatprep.subr.mxu0 0.0
  %111 = vmatpush2.msra.mxu0 0.0
  %112 = vmatprep.subr.mxu0 0.0
  %113 = vmatpush2.msra.mxu0 0.0
  %114 = vmatprep.mubr.f32.mxu0 0.0
  %115 = vmatmul.mubr.f32.gmra.mxu0 %v26
  %v116 = vpop.f32.mrf.mxu0
  %v117 = vadd.f32 %v48, %v116
  %v118 = vpop.f32.mrf.mxu0
  %119 = vdwg.mxu0
  %v120 = vld [vmem:[%s3] sm:$0xff]
  %v121 = vld [vmem:[%s3 + $0x8] sm:$0xff]
  %v122 = vld [vmem:[%s3 + $0x10] sm:$0xff]
  %v123 = vld [vmem:[%s3 + $0x18] sm:$0xff]
  %v124 = vld [vmem:[%s3 + $0x20] sm:$0xff]
  %v125 = vld [vmem:[%s3 + $0x28] sm:$0xff]
  %v126 = vld [vmem:[%s3 + $0x30] sm:$0xff]
  %v127 = vld [vmem:[%s3 + $0x38] sm:$0xff]
  %v128 = vld [vmem:[%s3 + $0x40] sm:$0xff]
  %v129 = vld [vmem:[%s3 + $0x48] sm:$0xff]
  %v130 = vld [vmem:[%s3 + $0x50] sm:$0xff]
  %v131 = vld [vmem:[%s3 + $0x58] sm:$0xff]
  %v132 = vld [vmem:[%s3 + $0x60] sm:$0xff]
  %v133 = vld [vmem:[%s3 + $0x68] sm:$0xff]
  %v134 = vld [vmem:[%s3 + $0x70] sm:$0xff]
  %v135 = vld [vmem:[%s3 + $0x78] sm:$0xff]
  %v136 = vld [vmem:[%s4] sm:$0x1]
  %v138 = vlaneseq
  %v139 = vshrl.u32 %v138, 7
  %v140 = vsub.s32 0, %v139
  %v141 = vrot.slane %v136, %v140
  %143 = vmatprep.subr.mxu0 0.0
  %144 = vmatpush1.msra.mxu0 %v135
  %145 = vmatprep.subr.mxu0 0.0
  %146 = vmatpush1.msra.mxu0 %v134
  %147 = vmatprep.subr.mxu0 0.0
  %148 = vmatpush1.msra.mxu0 %v133
  %149 = vmatprep.subr.mxu0 0.0
  %150 = vmatpush1.msra.mxu0 %v132
  %151 = vmatprep.subr.mxu0 0.0
  %152 = vmatpush1.msra.mxu0 %v131
  %153 = vmatprep.subr.mxu0 0.0
  %154 = vmatpush1.msra.mxu0 %v130
  %155 = vmatprep.subr.mxu0 0.0
  %156 = vmatpush1.msra.mxu0 %v129
  %157 = vmatprep.subr.mxu0 0.0
  %158 = vmatpush1.msra.mxu0 %v128
  %159 = vmatprep.subr.mxu0 0.0
  %160 = vmatpush1.msra.mxu0 %v127
  %161 = vmatprep.subr.mxu0 0.0
  %162 = vmatpush1.msra.mxu0 %v126
  %163 = vmatprep.subr.mxu0 0.0
  %164 = vmatpush1.msra.mxu0 %v125
  %165 = vmatprep.subr.mxu0 0.0
  %166 = vmatpush1.msra.mxu0 %v124
  %167 = vmatprep.subr.mxu0 0.0
  %168 = vmatpush1.msra.mxu0 %v123
  %169 = vmatprep.subr.mxu0 0.0
  %170 = vmatpush1.msra.mxu0 %v122
  %171 = vmatprep.subr.mxu0 0.0
  %172 = vmatpush1.msra.mxu0 %v121
  %173 = vmatprep.subr.mxu0 0.0
  %174 = vmatpush1.msra.mxu0 %v120
  %175 = vmatprep.subr.mxu0 0.0
  %176 = vmatpush2.msra.mxu0 0.0
  %177 = vmatprep.subr.mxu0 0.0
  %178 = vmatpush2.msra.mxu0 0.0
  %179 = vmatprep.subr.mxu0 0.0
  %180 = vmatpush2.msra.mxu0 0.0
  %181 = vmatprep.subr.mxu0 0.0
  %182 = vmatpush2.msra.mxu0 0.0
  %183 = vmatprep.subr.mxu0 0.0
  %184 = vmatpush2.msra.mxu0 0.0
  %185 = vmatprep.subr.mxu0 0.0
  %186 = vmatpush2.msra.mxu0 0.0
  %187 = vmatprep.subr.mxu0 0.0
  %188 = vmatpush2.msra.mxu0 0.0
  %189 = vmatprep.subr.mxu0 0.0
  %190 = vmatpush2.msra.mxu0 0.0
  %191 = vmatprep.subr.mxu0 0.0
  %192 = vmatpush2.msra.mxu0 0.0
  %193 = vmatprep.subr.mxu0 0.0
  %194 = vmatpush2.msra.mxu0 0.0
  %195 = vmatprep.subr.mxu0 0.0
  %196 = vmatpush2.msra.mxu0 0.0
  %197 = vmatprep.subr.mxu0 0.0
  %198 = vmatpush2.msra.mxu0 0.0
  %199 = vmatprep.subr.mxu0 0.0
  %200 = vmatpush2.msra.mxu0 0.0
  %201 = vmatprep.subr.mxu0 0.0
  %202 = vmatpush2.msra.mxu0 0.0
  %203 = vmatprep.subr.mxu0 0.0
  %204 = vmatpush2.msra.mxu0 0.0
  %205 = vmatprep.subr.mxu0 0.0
  %206 = vmatpush2.msra.mxu0 0.0
  %207 = vmatprep.mubr.f32.mxu0 0.0
  %208 = vmatmul.mubr.f32.gmra.mxu0 %v117
  %v209 = vpop.f32.mrf.mxu0
  %v210 = vadd.f32 %v141, %v209
  %v211 = vpop.f32.mrf.mxu0
  %212 = vdwg.mxu0
  %v213 = vld [vmem:[%s5] sm:$0xff]
  %v214 = vld [vmem:[%s5 + $0x8] sm:$0xff]
  %v215 = vld [vmem:[%s5 + $0x10] sm:$0xff]
  %v216 = vld [vmem:[%s5 + $0x18] sm:$0xff]
  %v217 = vld [vmem:[%s5 + $0x20] sm:$0xff]
  %v218 = vld [vmem:[%s5 + $0x28] sm:$0xff]
  %v219 = vld [vmem:[%s5 + $0x30] sm:$0xff]
  %v220 = vld [vmem:[%s5 + $0x38] sm:$0xff]
  %v221 = vld [vmem:[%s5 + $0x40] sm:$0xff]
  %v222 = vld [vmem:[%s5 + $0x48] sm:$0xff]
  %v223 = vld [vmem:[%s5 + $0x50] sm:$0xff]
  %v224 = vld [vmem:[%s5 + $0x58] sm:$0xff]
  %v225 = vld [vmem:[%s5 + $0x60] sm:$0xff]
  %v226 = vld [vmem:[%s5 + $0x68] sm:$0xff]
  %v227 = vld [vmem:[%s5 + $0x70] sm:$0xff]
  %v228 = vld [vmem:[%s5 + $0x78] sm:$0xff]
  %v229 = vld [vmem:[%s6] sm:$0x1]
  %v231 = vlaneseq
  %v232 = vshrl.u32 %v231, 7
  %v233 = vsub.s32 0, %v232
  %v234 = vrot.slane %v229, %v233
  %236 = vmatprep.subr.mxu0 0.0
  %237 = vmatpush1.msra.mxu0 %v228
  %238 = vmatprep.subr.mxu0 0.0
  %239 = vmatpush1.msra.mxu0 %v227
  %240 = vmatprep.subr.mxu0 0.0
  %241 = vmatpush1.msra.mxu0 %v226
  %242 = vmatprep.subr.mxu0 0.0
  %243 = vmatpush1.msra.mxu0 %v225
  %244 = vmatprep.subr.mxu0 0.0
  %245 = vmatpush1.msra.mxu0 %v224
  %246 = vmatprep.subr.mxu0 0.0
  %247 = vmatpush1.msra.mxu0 %v223
  %248 = vmatprep.subr.mxu0 0.0
  %249 = vmatpush1.msra.mxu0 %v222
  %250 = vmatprep.subr.mxu0 0.0
  %251 = vmatpush1.msra.mxu0 %v221
  %252 = vmatprep.subr.mxu0 0.0
  %253 = vmatpush1.msra.mxu0 %v220
  %254 = vmatprep.subr.mxu0 0.0
  %255 = vmatpush1.msra.mxu0 %v219
  %256 = vmatprep.subr.mxu0 0.0
  %257 = vmatpush1.msra.mxu0 %v218
  %258 = vmatprep.subr.mxu0 0.0
  %259 = vmatpush1.msra.mxu0 %v217
  %260 = vmatprep.subr.mxu0 0.0
  %261 = vmatpush1.msra.mxu0 %v216
  %262 = vmatprep.subr.mxu0 0.0
  %263 = vmatpush1.msra.mxu0 %v215
  %264 = vmatprep.subr.mxu0 0.0
  %265 = vmatpush1.msra.mxu0 %v214
  %266 = vmatprep.subr.mxu0 0.0
  %267 = vmatpush1.msra.mxu0 %v213
  %268 = vmatprep.subr.mxu0 0.0
  %269 = vmatpush2.msra.mxu0 0.0
  %270 = vmatprep.subr.mxu0 0.0
  %271 = vmatpush2.msra.mxu0 0.0
  %272 = vmatprep.subr.mxu0 0.0
  %273 = vmatpush2.msra.mxu0 0.0
  %274 = vmatprep.subr.mxu0 0.0
  %275 = vmatpush2.msra.mxu0 0.0
  %276 = vmatprep.subr.mxu0 0.0
  %277 = vmatpush2.msra.mxu0 0.0
  %278 = vmatprep.subr.mxu0 0.0
  %279 = vmatpush2.msra.mxu0 0.0
  %280 = vmatprep.subr.mxu0 0.0
  %281 = vmatpush2.msra.mxu0 0.0
  %282 = vmatprep.subr.mxu0 0.0
  %283 = vmatpush2.msra.mxu0 0.0
  %284 = vmatprep.subr.mxu0 0.0
  %285 = vmatpush2.msra.mxu0 0.0
  %286 = vmatprep.subr.mxu0 0.0
  %287 = vmatpush2.msra.mxu0 0.0
  %288 = vmatprep.subr.mxu0 0.0
  %289 = vmatpush2.msra.mxu0 0.0
  %290 = vmatprep.subr.mxu0 0.0
  %291 = vmatpush2.msra.mxu0 0.0
  %292 = vmatprep.subr.mxu0 0.0
  %293 = vmatpush2.msra.mxu0 0.0
  %294 = vmatprep.subr.mxu0 0.0
  %295 = vmatpush2.msra.mxu0 0.0
  %296 = vmatprep.subr.mxu0 0.0
  %297 = vmatpush2.msra.mxu0 0.0
  %298 = vmatprep.subr.mxu0 0.0
  %299 = vmatpush2.msra.mxu0 0.0
  %300 = vmatprep.mubr.f32.mxu0 0.0
  %301 = vmatmul.mubr.f32.gmra.mxu0 %v210
  %v302 = vpop.f32.mrf.mxu0
  %v303 = vadd.f32 %v234, %v302
  %v304 = vpop.f32.mrf.mxu0
  %305 = vdwg.mxu0
  %306 = vst [vmem:[%s7] sm:$0xff] %v303
  // Predicated region
  $region30: #{blob_model_forward.1} parent=0 // pred_check
    _
  $region31: #{blob_model_forward.1} parent=0 // pred_check_branch
    %308 = sbr.rel (0) target = $region33
  $region32: #{blob_model_forward.1} parent=0 // pred_region
    _
  $region33: #{blob_model_forward.1} parent=0 // pred_fallthru
    _
  // Predicated region
  $region34: #{blob_model_forward.1} parent=0 // pred_check
    _
  $region35: #{blob_model_forward.1} parent=0 // pred_check_branch
    %310 = sbr.rel (0) target = $region37
  $region36: #{blob_model_forward.1} parent=0 // pred_region
    _
  $region37: #{blob_model_forward.1} parent=0 // pred_fallthru
    _

</llo_original>
